<compile_context>
chip_gen: v7x
topology: tpu7x:2x2x1
jax: 0.10.0
libtpu: 0.0.40
codegen_flags: <defaults>
</compile_context>

<pallas_src>
import functools

import jax
import jax.numpy as jnp
from jax import lax
from jax.experimental import pallas as pl
from jax.experimental.pallas import tpu as pltpu


# ----------------------------- small helpers --------------------------------

def _sublane(dtype):
    """Sublane packing of `dtype`: 8 rows for f32, 16 for bf16, 32 for int8/fp8."""
    return max(8, 32 // jnp.dtype(dtype).itemsize)


def _pick_tile(dim, target, aligns):
    """Largest divisor of `dim` that is <= target and a multiple of one of `aligns`
    (tried in preference order); falls back to the full dim."""
    if dim <= target:
        return dim
    for align in aligns:
        t = (target // align) * align
        while t >= align:
            if dim % t == 0:
                return t
            t -= align
    return dim


def _vmem_limit_bytes():
    """~75% of physical VMEM (96 MiB on v5e/v6e, 48 MiB on v7x); None -> compiler default."""
    try:
        cap = int(pltpu.get_tpu_info().vmem_capacity_bytes)
        if cap > 0:
            return (cap * 3) // 4
    except Exception:
        pass
    return None


# ----------------------------- linear kernels -------------------------------

def _matmul_kernel(x_ref, w_ref, o_ref, acc_ref, *, operand_dtype):
    """Tiled o = x @ w with f32 accumulation over the K grid axis (no bias)."""
    k = pl.program_id(2)

    @pl.when(k == 0)
    def _():
        acc_ref[...] = jnp.zeros_like(acc_ref)

    a = x_ref[...]
    b = w_ref[...]
    if operand_dtype is not None:
        a = a.astype(operand_dtype)
        b = b.astype(operand_dtype)
    acc_ref[...] += jnp.dot(a, b, preferred_element_type=jnp.float32)

    @pl.when(k == pl.num_programs(2) - 1)
    def _():
        o_ref[...] = acc_ref[...].astype(o_ref.dtype)


def _matmul_bias_kernel(x_ref, w_ref, b_ref, o_ref, acc_ref, *, operand_dtype):
    """Tiled o = x @ w + b with f32 accumulation over the K grid axis."""
    k = pl.program_id(2)

    @pl.when(k == 0)
    def _():
        acc_ref[...] = jnp.zeros_like(acc_ref)

    a = x_ref[...]
    b = w_ref[...]
    if operand_dtype is not None:
        a = a.astype(operand_dtype)
        b = b.astype(operand_dtype)
    acc_ref[...] += jnp.dot(a, b, preferred_element_type=jnp.float32)

    @pl.when(k == pl.num_programs(2) - 1)
    def _():
        o_ref[...] = (acc_ref[...] + b_ref[...].astype(jnp.float32)).astype(o_ref.dtype)


def _linear(x2d, w, b=None, *, tm=512, tn=512, tk=1024, operand_dtype=None):
    """x2d: (M, K), w: (K, Nout), optional b: (Nout,) -> (M, Nout) tiled Pallas matmul."""
    M, K = x2d.shape
    Nout = w.shape[1]
    sub = _sublane(x2d.dtype)
    tm = _pick_tile(M, tm, (sub, 8))          # sublane-packed M tile
    tn = _pick_tile(Nout, tn, (256, 128))     # full-width MXU / lane-dense stores
    tk = _pick_tile(K, tk, (256, 128))

    grid = (M // tm, Nout // tn, K // tk)

    x_spec = pl.BlockSpec((tm, tk), lambda i, j, k: (i, k))
    w_spec = pl.BlockSpec((tk, tn), lambda i, j, k: (k, j))
    o_spec = pl.BlockSpec((tm, tn), lambda i, j, k: (i, j))
    scratch = [pltpu.VMEM((tm, tn), jnp.float32)]

    compiler_params = pltpu.CompilerParams(
        dimension_semantics=("parallel", "parallel", "arbitrary"),
        vmem_limit_bytes=_vmem_limit_bytes(),
    )

    if b is None:
        kernel = functools.partial(_matmul_kernel, operand_dtype=operand_dtype)
        in_specs = [x_spec, w_spec]
        operands = (x2d, w)
    else:
        kernel = functools.partial(_matmul_bias_kernel, operand_dtype=operand_dtype)
        in_specs = [x_spec, w_spec, pl.BlockSpec((1, tn), lambda i, j, k: (0, j))]
        operands = (x2d, w, b.reshape(1, Nout))

    return pl.pallas_call(
        kernel,
        out_shape=jax.ShapeDtypeStruct((M, Nout), x2d.dtype),
        grid_spec=pltpu.PrefetchScalarGridSpec(
            num_scalar_prefetch=0,
            grid=grid,
            in_specs=in_specs,
            out_specs=o_spec,
            scratch_shapes=scratch,
        ),
        compiler_params=compiler_params,
    )(*operands)


# ----------------------------- attention kernel -----------------------------

def _flash_attention_kernel(q_ref, kv_ref, o_ref, m_ref, l_ref, acc_ref, *,
                            num_heads, head_dim, operand_dtype):
    """Flash-style attention over all heads for one (batch, q-tile, kv-tile) step.

    q_ref:  (1, tq,  3C) block (only its first C columns are used; scale pre-folded).
    kv_ref: (1, tkv, 3C) block, columns laid out as [q | k | v], head-major inside.
    o_ref:  (1, tq,  C)  output block, written once (lane-dense) at the last KV step.
    m_ref/l_ref: (H, tq, 1) f32 online-softmax stats; acc_ref: (tq, C) f32 accumulator.
    """
    C = num_heads * head_dim
    kv_step = pl.program_id(2)
    last_kv = pl.num_programs(2) - 1

    @pl.when(kv_step == 0)
    def _():
        m_ref[...] = jnp.full_like(m_ref, -jnp.inf)
        l_ref[...] = jnp.zeros_like(l_ref)
        acc_ref[...] = jnp.zeros_like(acc_ref)

    # Heads as a static loop over static lane offsets (head_dim < 128 so per-head
    # BlockSpecs are not representable); all per-head state goes straight to scratch.
    for h in range(num_heads):
        hs = slice(h * head_dim, (h + 1) * head_dim)
        q = q_ref[0, :, h * head_dim:(h + 1) * head_dim]                 # (tq,  hd)
        k = kv_ref[0, :, C + h * head_dim:C + (h + 1) * head_dim]        # (tkv, hd)
        v = kv_ref[0, :, 2 * C + h * head_dim:2 * C + (h + 1) * head_dim]
        if operand_dtype is not None:
            q = q.astype(operand_dtype)
            k = k.astype(operand_dtype)
            v = v.astype(operand_dtype)

        # Contract the last dim of both operands: no explicit k.T (no XLU transpose).
        s = lax.dot_general(q, k, (((1,), (1,)), ((), ())),
                            preferred_element_type=jnp.float32)          # (tq, tkv)

        m_prev = m_ref[h]                                                # (tq, 1)
        m_new = jnp.maximum(m_prev, jnp.max(s, axis=-1, keepdims=True))
        alpha = jnp.exp(m_prev - m_new)
        p = jnp.exp(s - m_new)                                           # unnormalized
        l_ref[h] = alpha * l_ref[h] + jnp.sum(p, axis=-1, keepdims=True)
        m_ref[h] = m_new

        pv = jnp.dot(p.astype(v.dtype), v,
                     preferred_element_type=jnp.float32)                 # (tq, hd)
        acc_ref[:, hs] = alpha * acc_ref[:, hs] + pv

    @pl.when(kv_step == last_kv)
    def _():
        # Deferred 1/l normalization per head (EUP approx reciprocal), then a single
        # lane-dense (tq, C) store for the whole tile.
        for h in range(num_heads):
            hs = slice(h * head_dim, (h + 1) * head_dim)
            acc_ref[:, hs] = acc_ref[:, hs] * pl.reciprocal(l_ref[h], approx=True)
        o_ref[0] = acc_ref[...].astype(o_ref.dtype)


def _flash_attention(qkv, num_heads, *, tq=256, tkv=512, operand_dtype=None):
    """qkv: (B, N, 3C) -> attention output (B, N, C), head-major columns."""
    B, N, C3 = qkv.shape
    C = C3 // 3
    head_dim = C // num_heads
    sub = _sublane(qkv.dtype)
    tq = _pick_tile(N, tq, (sub, 8))
    tkv = _pick_tile(N, tkv, (sub, 8))
    grid = (B, N // tq, N // tkv)

    kernel = functools.partial(
        _flash_attention_kernel,
        num_heads=num_heads, head_dim=head_dim, operand_dtype=operand_dtype)

    return pl.pallas_call(
        kernel,
        out_shape=jax.ShapeDtypeStruct((B, N, C), qkv.dtype),
        grid_spec=pltpu.PrefetchScalarGridSpec(
            num_scalar_prefetch=0,
            grid=grid,
            in_specs=[
                # Q row-tile: index ignores kv -> resident across the KV axis.
                pl.BlockSpec((1, tq, C3), lambda b, qi, kv: (b, qi, 0)),
                # KV row-tile: streamed along the KV (arbitrary) axis.
                pl.BlockSpec((1, tkv, C3), lambda b, qi, kv: (b, kv, 0)),
            ],
            out_specs=pl.BlockSpec((1, tq, C), lambda b, qi, kv: (b, qi, 0)),
            scratch_shapes=[
                pltpu.VMEM((num_heads, tq, 1), jnp.float32),   # m (per head)
                pltpu.VMEM((num_heads, tq, 1), jnp.float32),   # l (per head)
                pltpu.VMEM((tq, C), jnp.float32),              # acc (all heads)
            ],
        ),
        compiler_params=pltpu.CompilerParams(
            dimension_semantics=("parallel", "parallel", "arbitrary"),
            vmem_limit_bytes=_vmem_limit_bytes(),
        ),
    )(qkv, qkv)


# ----------------------------- wrappers --------------------------------------

def prepare_attention_params(params, *, dim, num_heads):
    """One-time weight prep: fold the softmax scale into the Q columns of w_qkv
    (and b_qkv if present) so the attention kernel does no per-element scaling."""
    head_dim = dim // num_heads
    scale = head_dim ** (-0.5)
    prepared = dict(params)
    prepared["w_qkv"] = params["w_qkv"].at[:, :dim].multiply(scale)
    if params.get("b_qkv") is not None:
        prepared["b_qkv"] = params["b_qkv"].at[:dim].multiply(scale)
    return prepared


def attention_forward(x, params, num_heads, *, operand_dtype=None):
    """Pallas Attention.forward (eval mode, qk_norm=False). `params` must already have
    the softmax scale folded into w_qkv (see prepare_attention_params)."""
    B, N, C = x.shape

    # --- qkv projection: (B*N, C) @ (C, 3C); bias-free path when qkv_bias=False ---
    x2d = x.reshape(B * N, C)
    qkv = _linear(x2d, params["w_qkv"], params.get("b_qkv"),
                  operand_dtype=operand_dtype)                 # (B*N, 3C)
    qkv = qkv.reshape(B, N, 3 * C)                             # free reshape, no transpose

    # --- flash attention, output already in (B, N, C) layout for the projection ---
    attn = _flash_attention(qkv, num_heads, operand_dtype=operand_dtype)

    # --- output projection ---
    out = _linear(attn.reshape(B * N, C), params["w_proj"], params["b_proj"],
                  operand_dtype=operand_dtype)
    return out.reshape(B, N, C)


# ----------------------------- reference (pure JAX) --------------------------

def attention_reference(x, params, num_heads):
    B, N, C = x.shape
    head_dim = C // num_heads
    scale = head_dim ** (-0.5)
    qkv = x.reshape(B * N, C) @ params["w_qkv"]
    if params.get("b_qkv") is not None:
        qkv = qkv + params["b_qkv"]
    qkv = qkv.reshape(B, N, 3, num_heads, head_dim).transpose(2, 0, 3, 1, 4)
    q, k, v = qkv[0], qkv[1], qkv[2]
    s = jnp.einsum("bhqd,bhkd->bhqk", q * scale, k)
    p = jax.nn.softmax(s, axis=-1)
    o = jnp.einsum("bhqk,bhkd->bhqd", p, v)
    o = o.transpose(0, 2, 1, 3).reshape(B * N, C)
    o = o @ params["w_proj"] + params["b_proj"]
    return o.reshape(B, N, C)


# ----------------------------- main -------------------------------------------

if __name__ == "__main__":
    B, N, C = 2, 8, 32
    num_heads = 8  # head_dim = 4

    key = jax.random.PRNGKey(0)
    kx, kq, kp, kb = jax.random.split(key, 4)

    x = jax.random.normal(kx, (B, N, C), dtype=jnp.float32)

    params = {
        # qkv_bias=False in the module -> no qkv bias at all.
        "w_qkv": jax.random.normal(kq, (C, 3 * C), dtype=jnp.float32) * 0.02,
        "w_proj": jax.random.normal(kp, (C, C), dtype=jnp.float32) * 0.02,
        "b_proj": jax.random.normal(kb, (C,), dtype=jnp.float32) * 0.02,
    }

    prepared = prepare_attention_params(params, dim=C, num_heads=num_heads)

    out = attention_forward(x, prepared, num_heads)
    out = jax.block_until_ready(out)

    ref = attention_reference(x, params, num_heads)
    assert out.shape == (B, N, C)
    assert jnp.allclose(out, ref, atol=1e-3, rtol=1e-3), "mismatch vs reference"

    print("KERNEL_OK")
</pallas_src>

<mosaic_0001>
module attributes {stable_mosaic.version = 11 : i64} {
  func.func @_matmul_kernel(%arg0: i32, %arg1: i32, %arg2: i32, %arg3: memref<16x32xf32, #tpu.memory_space<vmem>>, %arg4: memref<32x96xf32, #tpu.memory_space<vmem>>, %arg5: memref<16x96xf32, #tpu.memory_space<vmem>>, %arg6: memref<16x96xf32, #tpu.memory_space<vmem>>) attributes {dimension_semantics = [#tpu.dimension_semantics<parallel>, #tpu.dimension_semantics<parallel>, #tpu.dimension_semantics<arbitrary>], iteration_bounds = array<i64: 1, 1, 1>, scalar_prefetch = 0 : i64, scratch_operands = 1 : i64, tpu.core_type = #tpu.core_type<tc>, window_params = [{transform_indices = @transform_0, window_bounds = array<i64: 16, 32>}, {transform_indices = @transform_1, window_bounds = array<i64: 32, 96>}, {transform_indices = @transform_2, window_bounds = array<i64: 16, 96>}]} {
    %c0_i32 = arith.constant 0 : i32
    %0 = arith.cmpi eq, %arg2, %c0_i32 : i32
    %1 = arith.extui %0 : i1 to i32
    %c0_i32_0 = arith.constant 0 : i32
    %2 = arith.cmpi ne, %1, %c0_i32_0 : i32
    scf.if %2 {
      %cst_10 = arith.constant 0.000000e+00 : f32
      %12 = vector.broadcast %cst_10 : f32 to vector<16x96xf32>
      %c0_11 = arith.constant 0 : index
      %c0_12 = arith.constant 0 : index
      %13 = vector.load %arg6[%c0_11, %c0_12] : memref<16x96xf32, #tpu.memory_space<vmem>>, vector<16x96xf32>
      tpu.vector_store %arg6[%c0_11, %c0_12], %12 {strides = array<i32>} : memref<16x96xf32, #tpu.memory_space<vmem>>, vector<16x96xf32>,
    } else {
    }
    %c0 = arith.constant 0 : index
    %c0_1 = arith.constant 0 : index
    %3 = vector.load %arg3[%c0, %c0_1] : memref<16x32xf32, #tpu.memory_space<vmem>>, vector<16x32xf32>
    %c0_2 = arith.constant 0 : index
    %c0_3 = arith.constant 0 : index
    %4 = vector.load %arg4[%c0_2, %c0_3] : memref<32x96xf32, #tpu.memory_space<vmem>>, vector<32x96xf32>
    %c0_4 = arith.constant 0 : index
    %c0_5 = arith.constant 0 : index
    %5 = vector.load %arg6[%c0_4, %c0_5] : memref<16x96xf32, #tpu.memory_space<vmem>>, vector<16x96xf32>
    %cst = arith.constant dense<0.000000e+00> : vector<16x96xf32>
    %6 = tpu.matmul %3, %4, %cst {dimension_numbers = #tpu.dot_dimension_numbers<[1], [0], [0], [1], [0, 0, 1, 1], [], []>} : vector<16x32xf32>, vector<32x96xf32>, vector<16x96xf32> -> vector<16x96xf32>
    %7 = arith.addf %5, %6 : vector<16x96xf32>
    %c0_6 = arith.constant 0 : index
    %c0_7 = arith.constant 0 : index
    %8 = vector.load %arg6[%c0_6, %c0_7] : memref<16x96xf32, #tpu.memory_space<vmem>>, vector<16x96xf32>
    tpu.vector_store %arg6[%c0_6, %c0_7], %7 {strides = array<i32>} : memref<16x96xf32, #tpu.memory_space<vmem>>, vector<16x96xf32>,
    %c0_i32_8 = arith.constant 0 : i32
    %9 = arith.cmpi eq, %arg2, %c0_i32_8 : i32
    %10 = arith.extui %9 : i1 to i32
    %c0_i32_9 = arith.constant 0 : i32
    %11 = arith.cmpi ne, %10, %c0_i32_9 : i32
    scf.if %11 {
      %c0_10 = arith.constant 0 : index
      %c0_11 = arith.constant 0 : index
      %12 = vector.load %arg6[%c0_10, %c0_11] : memref<16x96xf32, #tpu.memory_space<vmem>>, vector<16x96xf32>
      %c0_12 = arith.constant 0 : index
      %c0_13 = arith.constant 0 : index
      %13 = vector.load %arg5[%c0_12, %c0_13] : memref<16x96xf32, #tpu.memory_space<vmem>>, vector<16x96xf32>
      tpu.vector_store %arg5[%c0_12, %c0_13], %12 {strides = array<i32>} : memref<16x96xf32, #tpu.memory_space<vmem>>, vector<16x96xf32>,
    } else {
    }
    return
  }
  func.func @transform_0(%arg0: i32, %arg1: i32, %arg2: i32) -> (i32, i32) {
    %c0_i32 = arith.constant 0 : i32
    return %arg0, %arg2 : i32, i32
  }
  func.func @transform_1(%arg0: i32, %arg1: i32, %arg2: i32) -> (i32, i32) {
    %c0_i32 = arith.constant 0 : i32
    return %arg2, %arg1 : i32, i32
  }
  func.func @transform_2(%arg0: i32, %arg1: i32, %arg2: i32) -> (i32, i32) {
    %c0_i32 = arith.constant 0 : i32
    return %arg0, %arg1 : i32, i32
  }
}

</mosaic_0001>

<llo_original>
// kernel: tpu_custom_call.1
$region0: #{tpu_custom_call.1}
  #allocation0 [shape = 'u32[]', space=smem, size = 0x4, offset = 0x4, fixed_abs, tag = 'smem constant byte address 0x4 - core index']
  #allocation1 [shape = 'u32[144,128]{1,0:T(1,128)}', space=vmem, size = 0x12000, scoped, tag = 'internal scratch']
  #allocation2 [shape = 'f32[16,96]{1,0:T(8,128)}', space=vmem, size = 0x2000, scoped, tag = 'scratch operand']
  %s0 = inlined_call_operand.hbm [shape: f32[16,32], index: 0, kind: input, shape index: {}]
  %s1 = inlined_call_operand.hbm [shape: f32[32,96], index: 1, kind: input, shape index: {}]
  %s2 = inlined_call_operand.hbm [shape: f32[16,96], index: 2, kind: output, shape index: {}]
  %s3 = sld [smem:[#allocation0]]
  $region34: #{tpu_custom_call.1} parent=0
    _
  %s5 = ssub.s32 1, %s3
  %s6 = scalar_select 0, %s5, %s3
  $region1: #{tpu_custom_call.1} parent=0
    #allocation3 [shape = 'u8[8192]{0}', space=vmem, size = 0x2000, scoped, tag = 'input window, operand 0, single buffered']
    #allocation4 [shape = 's32[1]{0}', space=sflag, size = 0x4, scoped, tag = 'scoped memory for tpu_custom_call.1']
    #allocation5 [shape = 's32[1]{0}', space=sflag, size = 0x4, scoped, tag = 'scoped memory for tpu_custom_call.1']
    #allocation6 [shape = 'u8[16384]{0}', space=vmem, size = 0x4000, scoped, tag = 'input window, operand 1, single buffered']
    #allocation7 [shape = 's32[1]{0}', space=sflag, size = 0x4, scoped, tag = 'scoped memory for tpu_custom_call.1']
    #allocation8 [shape = 'u8[8192]{0}', space=vmem, size = 0x2000, scoped, tag = 'output window, operand 0, single buffered']
    %7 = vsyncpa [#allocation4], 0
    %8 = vsyncpa [#allocation7], 0
    %9 = vsyncpa [#allocation5], 0
    // Predicated region
    $region2: #{tpu_custom_call.1} parent=1 // pred_check
      _
    $region3: #{tpu_custom_call.1} parent=1 // pred_check_branch
      %11 = sbr.rel (0) target = $region5
    $region4: #{tpu_custom_call.1} parent=1 // pred_region
      %s13 = ssub.s32 256, 256
      %14 = vsyncadd [#allocation4], %s13
      %s15 = sshll.u32 [#allocation3], 4
      %s16 = int_to_ptr.vmem [resolvable:$true] %s15
      %21 = dma.hbm_to_vmem [thread:$0]  %s0, 256, %s16, [#allocation4], 128, 128, 8
    $region5: #{tpu_custom_call.1} parent=1 // pred_fallthru
      _
    // Predicated region
    $region6: #{tpu_custom_call.1} parent=1 // pred_check
      _
    $region7: #{tpu_custom_call.1} parent=1 // pred_check_branch
      %23 = sbr.rel (0) target = $region9
    $region8: #{tpu_custom_call.1} parent=1 // pred_region
      %s25 = ssub.s32 512, 512
      %26 = vsyncadd [#allocation7], %s25
      %s27 = sshll.u32 [#allocation6], 4
      %s28 = int_to_ptr.vmem [resolvable:$true] %s27
      %33 = dma.hbm_to_vmem [thread:$0]  %s1, 512, %s28, [#allocation7], 128, 128, 8
    $region9: #{tpu_custom_call.1} parent=1 // pred_fallthru
      _
    // Predicated region
    $region10: #{tpu_custom_call.1} parent=1 // pred_check
      _
    $region11: #{tpu_custom_call.1} parent=1 // pred_check_branch
      %35 = sbr.rel (0) target = $region13
    $region12: #{tpu_custom_call.1} parent=1 // pred_region
      %36 = dma.done [#allocation4], 256
    $region13: #{tpu_custom_call.1} parent=1 // pred_fallthru
      _
    // Predicated region
    $region14: #{tpu_custom_call.1} parent=1 // pred_check
      _
    $region15: #{tpu_custom_call.1} parent=1 // pred_check_branch
      %38 = sbr.rel (0) target = $region17
    $region16: #{tpu_custom_call.1} parent=1 // pred_region
      %39 = dma.done [#allocation7], 512
    $region17: #{tpu_custom_call.1} parent=1 // pred_fallthru
      _
    %p40 = scmp.eq.s32.totalorder 0, 0
    // Predicated region
    $region18: #{tpu_custom_call.1} parent=1 // pred_check
      %p41 = pneg %p40
    $region19: #{tpu_custom_call.1} parent=1 // pred_check_branch
      %43 = sbr.rel (%p41) target = $region21
    $region20: #{tpu_custom_call.1} parent=1 // pred_region
      %vm44 = vcmask 785408
      %45 = vst.msk [vmem:[#allocation2] sm:$0xff] %vm44, 0.0
      %46 = vst.msk [vmem:[#allocation2 + $0x8] sm:$0xff] %vm44, 0.0
    $region21: #{tpu_custom_call.1} parent=1 // pred_fallthru
      _
    %v47 = vld [vmem:[#allocation3] sm:$0xff]
    %v48 = vld [vmem:[#allocation3 + $0x8] sm:$0xff]
    %v49 = vld [vmem:[#allocation6] sm:$0xff]
    %v50 = vld [vmem:[#allocation6 + $0x8] sm:$0xff]
    %v51 = vld [vmem:[#allocation6 + $0x10] sm:$0xff]
    %v52 = vld [vmem:[#allocation6 + $0x18] sm:$0xff]
    %v53 = vld [vmem:[#allocation2] sm:$0xff]
    %v54 = vld [vmem:[#allocation2 + $0x8] sm:$0xff]
    %vm55 = vcmask 261120
    %v57 = vsel %vm55, %v47, 0
    %v60 = vsel %vm55, %v48, 0
    %62 = vmatprep.subr.mxu0 0.0
    %63 = vmatpush1.msra.mxu0 %v49
    %64 = vmatprep.subr.mxu0 0.0
    %65 = vmatpush1.msra.mxu0 %v50
    %66 = vmatprep.subr.mxu0 0.0
    %67 = vmatpush1.msra.mxu0 %v51
    %68 = vmatprep.subr.mxu0 0.0
    %69 = vmatpush1.msra.mxu0 %v52
    %70 = vmatprep.subr.mxu0 0.0
    %71 = vmatpush1.msra.mxu0 0.0
    %72 = vmatprep.subr.mxu0 0.0
    %73 = vmatpush1.msra.mxu0 0.0
    %74 = vmatprep.subr.mxu0 0.0
    %75 = vmatpush1.msra.mxu0 0.0
    %76 = vmatprep.subr.mxu0 0.0
    %77 = vmatpush1.msra.mxu0 0.0
    %78 = vmatprep.subr.mxu0 0.0
    %79 = vmatpush1.msra.mxu0 0.0
    %80 = vmatprep.subr.mxu0 0.0
    %81 = vmatpush1.msra.mxu0 0.0
    %82 = vmatprep.subr.mxu0 0.0
    %83 = vmatpush1.msra.mxu0 0.0
    %84 = vmatprep.subr.mxu0 0.0
    %85 = vmatpush1.msra.mxu0 0.0
    %86 = vmatprep.subr.mxu0 0.0
    %87 = vmatpush1.msra.mxu0 0.0
    %88 = vmatprep.subr.mxu0 0.0
    %89 = vmatpush1.msra.mxu0 0.0
    %90 = vmatprep.subr.mxu0 0.0
    %91 = vmatpush1.msra.mxu0 0.0
    %92 = vmatprep.subr.mxu0 0.0
    %93 = vmatpush1.msra.mxu0 0.0
    %94 = vmatprep.subr.mxu0 0.0
    %95 = vmatpush1.msra.mxu0 0.0
    %96 = vmatprep.subr.mxu0 0.0
    %97 = vmatpush1.msra.mxu0 0.0
    %98 = vmatprep.subr.mxu0 0.0
    %99 = vmatpush1.msra.mxu0 0.0
    %100 = vmatprep.subr.mxu0 0.0
    %101 = vmatpush1.msra.mxu0 0.0
    %102 = vmatprep.subr.mxu0 0.0
    %103 = vmatpush1.msra.mxu0 0.0
    %104 = vmatprep.subr.mxu0 0.0
    %105 = vmatpush1.msra.mxu0 0.0
    %106 = vmatprep.subr.mxu0 0.0
    %107 = vmatpush1.msra.mxu0 0.0
    %108 = vmatprep.subr.mxu0 0.0
    %109 = vmatpush1.msra.mxu0 0.0
    %110 = vmatprep.subr.mxu0 0.0
    %111 = vmatpush1.msra.mxu0 0.0
    %112 = vmatprep.subr.mxu0 0.0
    %113 = vmatpush1.msra.mxu0 0.0
    %114 = vmatprep.subr.mxu0 0.0
    %115 = vmatpush1.msra.mxu0 0.0
    %116 = vmatprep.subr.mxu0 0.0
    %117 = vmatpush1.msra.mxu0 0.0
    %118 = vmatprep.subr.mxu0 0.0
    %119 = vmatpush1.msra.mxu0 0.0
    %120 = vmatprep.subr.mxu0 0.0
    %121 = vmatpush1.msra.mxu0 0.0
    %122 = vmatprep.subr.mxu0 0.0
    %123 = vmatpush1.msra.mxu0 0.0
    %124 = vmatprep.subr.mxu0 0.0
    %125 = vmatpush1.msra.mxu0 0.0
    %126 = vmatprep.mubr.f32.mxu0 0.0
    %127 = vmatmul.mubr.f32.gmra.mrb[0].mxu0 %v57
    %v128 = vpop.f32.mrb[0].mxu0
    %v129 = vadd.f32 0.0, %v128
    %v130 = vpop.f32.mrb[0].mxu0
    %131 = vmatprep.mubr.f32.mxu0 0.0
    %132 = vmatmul.mubr.f32.gmra.mrb[0].mxu0 %v60
    %v133 = vpop.f32.mrb[0].mxu0
    %v134 = vadd.f32 0.0, %v133
    %v135 = vpop.f32.mrb[0].mxu0
    %136 = vdwg.mxu0
    %v137 = vadd.f32 %v53, %v129
    %v138 = vadd.f32 %v54, %v134
    %vm139 = vcmask 785408
    %140 = vst.msk [vmem:[#allocation2] sm:$0xff] %vm139, %v137
    %141 = vst.msk [vmem:[#allocation2 + $0x8] sm:$0xff] %vm139, %v138
    // Predicated region
    $region22: #{tpu_custom_call.1} parent=1 // pred_check
      %p142 = pneg %p40
    $region23: #{tpu_custom_call.1} parent=1 // pred_check_branch
      %144 = sbr.rel (%p142) target = $region25
    $region24: #{tpu_custom_call.1} parent=1 // pred_region
      %v145 = vld [vmem:[#allocation2] sm:$0xff]
      %v146 = vld [vmem:[#allocation2 + $0x8] sm:$0xff]
      %147 = vst.msk [vmem:[#allocation8] sm:$0xff] %vm139, %v145
      %148 = vst.msk [vmem:[#allocation8 + $0x8] sm:$0xff] %vm139, %v146
    $region25: #{tpu_custom_call.1} parent=1 // pred_fallthru
      _
    // Predicated region
    $region26: #{tpu_custom_call.1} parent=1 // pred_check
      _
    $region27: #{tpu_custom_call.1} parent=1 // pred_check_branch
      %150 = sbr.rel (0) target = $region29
    $region28: #{tpu_custom_call.1} parent=1 // pred_region
      %s152 = ssub.s32 256, 256
      %153 = vsyncadd [#allocation5], %s152
      %s154 = sshll.u32 [#allocation8], 4
      %s155 = int_to_ptr.vmem [resolvable:$true] %s154
      %160 = dma.vmem_to_hbm [thread:$0]  %s155, 256, %s2, [#allocation5], 128, 128, 8
    $region29: #{tpu_custom_call.1} parent=1 // pred_fallthru
      _
    // Predicated region
    $region30: #{tpu_custom_call.1} parent=1 // pred_check
      _
    $region31: #{tpu_custom_call.1} parent=1 // pred_check_branch
      %162 = sbr.rel (0) target = $region33
    $region32: #{tpu_custom_call.1} parent=1 // pred_region
      %163 = dma.done [#allocation5], 256
    $region33: #{tpu_custom_call.1} parent=1 // pred_fallthru
      _
    %164 = vsyncpa [#allocation4], 1
    %165 = vsyncpa [#allocation7], 1
    %166 = vsyncpa [#allocation5], 1

</llo_original>
